<compile_context>
chip_gen: v6e
topology: v6e:2x2x1
jax: 0.10.0
libtpu: 0.0.40
codegen_flags: <defaults>
</compile_context>

<pallas_src>
import functools

import jax
import jax.numpy as jnp
from jax.experimental import pallas as pl
from jax.experimental.pallas import tpu as pltpu


def _hard_mesh_kernel(in_ref, w1x_ref, w1y_ref, b1_ref, w2_ref, b2_ref,
                      w3_ref, b3_ref, out_ref, *, distance):
    # in_ref: (4, TILE_N) slab, rows = [x, y, Xp, Yp]
    x_row = in_ref[0:1, :]            # (1, TILE_N)
    y_row = in_ref[1:2, :]            # (1, TILE_N)
    p_rows = in_ref[2:4, :]           # (2, TILE_N)  [Xp ; Yp]

    # Layer 1 (Linear(2,50) + Tanh): the K=2 matmul is replaced by two
    # broadcast FMAs on the VPU (a K=2 matmul would use ~0% of the MXU).
    h1 = jnp.tanh(w1x_ref[...] * x_row + w1y_ref[...] * y_row + b1_ref[...])
    # (50,1)*(1,T) + (50,1)*(1,T) + (50,1) -> (50, TILE_N)

    # Layer 2 (Linear(50,50) + Tanh): real MXU matmul, f32 accumulation.
    h2 = jnp.tanh(jnp.dot(w2_ref[...], h1, preferred_element_type=jnp.float32)
                  + b2_ref[...])

    # Layer 3 (Linear(50,2)): (2,50) @ (50,TILE_N) -> (2, TILE_N)
    uhat = (jnp.dot(w3_ref[...], h2, preferred_element_type=jnp.float32)
            + b3_ref[...])

    # X = Xp + d*X_nn ; Y = Yp + d*Y_nn, as one full (2, TILE_N) lane-dense
    # store (no single-lane slicing, no masked vst).
    out_ref[...] = p_rows + distance * uhat


def hard_mesh_forward(x, y, xp, yp, distance, params, *, tile_n=1024):
    """Pallas implementation of HardMesh.forward.

    x, y, xp, yp : (N, 1) float32
    distance     : python float (hard-constraint distance scale)
    params       : torch-layout weights: w1 (50,2), b1 (50,), w2 (50,50),
                   b2 (50,), w3 (2,50), b3 (2,)
    returns (X, Y), each (N, 1) float32
    """
    N = x.shape[0]

    # Lane-dense tiling: N on the lane axis, tile a multiple of 128.
    tile_n = pl.cdiv(tile_n, 128) * 128
    tile_n = min(tile_n, pl.cdiv(N, 128) * 128)   # don't over-pad tiny N
    n_pad = pl.cdiv(N, tile_n) * tile_n
    grid = (n_pad // tile_n,)

    # Pack the four (N,1) per-point columns into one (4, n_pad) slab.
    slab = jnp.concatenate([x.T, y.T, xp.T, yp.T], axis=0).astype(jnp.float32)
    if n_pad != N:
        slab = jnp.pad(slab, ((0, 0), (0, n_pad - N)))

    # Weights in torch (out, in) layout, biases as (out, 1) columns.
    w1 = params["w1"].astype(jnp.float32)                   # (50, 2)
    w1x, w1y = w1[:, 0:1], w1[:, 1:2]                       # split at trace time
    b1 = params["b1"].reshape(-1, 1).astype(jnp.float32)    # (50, 1)
    w2 = params["w2"].astype(jnp.float32)                   # (50, 50)
    b2 = params["b2"].reshape(-1, 1).astype(jnp.float32)    # (50, 1)
    w3 = params["w3"].astype(jnp.float32)                   # (2, 50)
    b3 = params["b3"].reshape(-1, 1).astype(jnp.float32)    # (2, 1)

    resident = lambda shape: pl.BlockSpec(shape, lambda i: (0, 0))

    out = pl.pallas_call(
        functools.partial(_hard_mesh_kernel, distance=float(distance)),
        out_shape=jax.ShapeDtypeStruct((2, n_pad), jnp.float32),
        grid=grid,
        in_specs=[
            pl.BlockSpec((4, tile_n), lambda i: (0, i)),    # packed x/y/Xp/Yp
            resident((50, 1)),     # W1[:, 0]
            resident((50, 1)),     # W1[:, 1]
            resident((50, 1)),     # b1
            resident((50, 50)),    # W2
            resident((50, 1)),     # b2
            resident((2, 50)),     # W3
            resident((2, 1)),      # b3
        ],
        out_specs=pl.BlockSpec((2, tile_n), lambda i: (0, i)),
        compiler_params=pltpu.CompilerParams(
            dimension_semantics=("parallel",)),
    )(slab, w1x, w1y, b1, w2, b2, w3, b3)

    X = out[0, :N].reshape(N, 1)
    Y = out[1, :N].reshape(N, 1)
    return X, Y


def _xavier_uniform(key, fan_out, fan_in):
    # matches torch.nn.init.xavier_uniform_; stored as (out, in) like torch.
    bound = (6.0 / (fan_in + fan_out)) ** 0.5
    return jax.random.uniform(key, (fan_out, fan_in), jnp.float32,
                              minval=-bound, maxval=bound)


def init_params(key):
    k1, k2, k3 = jax.random.split(key, 3)
    return {
        "w1": _xavier_uniform(k1, 50, 2),
        "b1": jnp.zeros((50,), jnp.float32),
        "w2": _xavier_uniform(k2, 50, 50),
        "b2": jnp.zeros((50,), jnp.float32),
        "w3": _xavier_uniform(k3, 2, 50),
        "b3": jnp.zeros((2,), jnp.float32),
    }


def _reference_forward(x, y, xp, yp, distance, params):
    u = jnp.concatenate([x, y], axis=1)                         # (N, 2)
    h1 = jnp.tanh(u @ params["w1"].T + params["b1"])
    h2 = jnp.tanh(h1 @ params["w2"].T + params["b2"])
    uhat = h2 @ params["w3"].T + params["b3"]
    return xp + distance * uhat[:, 0:1], yp + distance * uhat[:, 1:2]


if __name__ == "__main__":
    key = jax.random.PRNGKey(0)
    kp, kx, ky, ku = jax.random.split(key, 4)

    distance = 0.25             # scalar distance-function scale (synthetic)
    params = init_params(kp)

    # Case 1: small N (single 128-lane tile, tail padding).
    # Case 2: N=1000 with tile_n=256 -> 4-step pipelined grid + padded tail.
    for N, tile_n in ((64, 1024), (1000, 256)):
        kx_n = jax.random.fold_in(kx, N)
        ky_n = jax.random.fold_in(ky, N)
        ku_n = jax.random.fold_in(ku, N)

        Up = jax.random.uniform(ku_n, (N, 2), jnp.float32)
        Xp, Yp = Up[:, 0:1], Up[:, 1:2]
        x = jax.random.uniform(kx_n, (N, 1), jnp.float32)
        y = jax.random.uniform(ky_n, (N, 1), jnp.float32)

        X, Y = hard_mesh_forward(x, y, Xp, Yp, distance, params, tile_n=tile_n)
        X = jax.block_until_ready(X)
        Y = jax.block_until_ready(Y)

        X_ref, Y_ref = _reference_forward(x, y, Xp, Yp, distance, params)
        assert jnp.allclose(X, X_ref, atol=1e-5, rtol=1e-5), f"X mismatch N={N}"
        assert jnp.allclose(Y, Y_ref, atol=1e-5, rtol=1e-5), f"Y mismatch N={N}"

    print("KERNEL_OK")
</pallas_src>

<mosaic_0001>
module attributes {stable_mosaic.version = 11 : i64} {
  func.func @_hard_mesh_kernel(%arg0: i32, %arg1: memref<4x128xf32, #tpu.memory_space<vmem>>, %arg2: memref<50x1xf32, #tpu.memory_space<vmem>>, %arg3: memref<50x1xf32, #tpu.memory_space<vmem>>, %arg4: memref<50x1xf32, #tpu.memory_space<vmem>>, %arg5: memref<50x50xf32, #tpu.memory_space<vmem>>, %arg6: memref<50x1xf32, #tpu.memory_space<vmem>>, %arg7: memref<2x50xf32, #tpu.memory_space<vmem>>, %arg8: memref<2x1xf32, #tpu.memory_space<vmem>>, %arg9: memref<2x128xf32, #tpu.memory_space<vmem>>) attributes {dimension_semantics = [#tpu.dimension_semantics<parallel>], iteration_bounds = array<i64: 1>, scalar_prefetch = 0 : i64, scratch_operands = 0 : i64, tpu.core_type = #tpu.core_type<tc>, window_params = [{transform_indices = @transform_0, window_bounds = array<i64: 4, 128>}, {pipeline_mode = #tpu.pipeline_mode<synchronous>, transform_indices = @transform_1, window_bounds = array<i64: 50, 1>}, {pipeline_mode = #tpu.pipeline_mode<synchronous>, transform_indices = @transform_2, window_bounds = array<i64: 50, 1>}, {pipeline_mode = #tpu.pipeline_mode<synchronous>, transform_indices = @transform_3, window_bounds = array<i64: 50, 1>}, {pipeline_mode = #tpu.pipeline_mode<synchronous>, transform_indices = @transform_4, window_bounds = array<i64: 50, 50>}, {pipeline_mode = #tpu.pipeline_mode<synchronous>, transform_indices = @transform_5, window_bounds = array<i64: 50, 1>}, {pipeline_mode = #tpu.pipeline_mode<synchronous>, transform_indices = @transform_6, window_bounds = array<i64: 2, 50>}, {pipeline_mode = #tpu.pipeline_mode<synchronous>, transform_indices = @transform_7, window_bounds = array<i64: 2, 1>}, {transform_indices = @transform_8, window_bounds = array<i64: 2, 128>}]} {
    %c0 = arith.constant 0 : index
    %c0_0 = arith.constant 0 : index
    %0 = vector.load %arg1[%c0, %c0_0] : memref<4x128xf32, #tpu.memory_space<vmem>>, vector<1x128xf32>
    %c1 = arith.constant 1 : index
    %c0_1 = arith.constant 0 : index
    %1 = vector.load %arg1[%c1, %c0_1] : memref<4x128xf32, #tpu.memory_space<vmem>>, vector<1x128xf32>
    %c2 = arith.constant 2 : index
    %c0_2 = arith.constant 0 : index
    %2 = vector.load %arg1[%c2, %c0_2] : memref<4x128xf32, #tpu.memory_space<vmem>>, vector<2x128xf32>
    %c0_3 = arith.constant 0 : index
    %c0_4 = arith.constant 0 : index
    %3 = vector.load %arg2[%c0_3, %c0_4] : memref<50x1xf32, #tpu.memory_space<vmem>>, vector<50x1xf32>
    %4 = vector.broadcast %3 : vector<50x1xf32> to vector<50x128xf32>
    %5 = vector.broadcast %0 : vector<1x128xf32> to vector<50x128xf32>
    %6 = arith.mulf %4, %5 : vector<50x128xf32>
    %c0_5 = arith.constant 0 : index
    %c0_6 = arith.constant 0 : index
    %7 = vector.load %arg3[%c0_5, %c0_6] : memref<50x1xf32, #tpu.memory_space<vmem>>, vector<50x1xf32>
    %8 = vector.broadcast %7 : vector<50x1xf32> to vector<50x128xf32>
    %9 = vector.broadcast %1 : vector<1x128xf32> to vector<50x128xf32>
    %10 = arith.mulf %8, %9 : vector<50x128xf32>
    %11 = arith.addf %6, %10 : vector<50x128xf32>
    %c0_7 = arith.constant 0 : index
    %c0_8 = arith.constant 0 : index
    %12 = vector.load %arg4[%c0_7, %c0_8] : memref<50x1xf32, #tpu.memory_space<vmem>>, vector<50x1xf32>
    %13 = vector.broadcast %12 : vector<50x1xf32> to vector<50x128xf32>
    %14 = arith.addf %11, %13 : vector<50x128xf32>
    %15 = math.tanh %14 : vector<50x128xf32>
    %c0_9 = arith.constant 0 : index
    %c0_10 = arith.constant 0 : index
    %16 = vector.load %arg5[%c0_9, %c0_10] : memref<50x50xf32, #tpu.memory_space<vmem>>, vector<50x50xf32>
    %cst = arith.constant dense<0.000000e+00> : vector<50x128xf32>
    %17 = tpu.matmul %16, %15, %cst {dimension_numbers = #tpu.dot_dimension_numbers<[1], [0], [0], [1], [0, 0, 1, 1], [], []>} : vector<50x50xf32>, vector<50x128xf32>, vector<50x128xf32> -> vector<50x128xf32>
    %c0_11 = arith.constant 0 : index
    %c0_12 = arith.constant 0 : index
    %18 = vector.load %arg6[%c0_11, %c0_12] : memref<50x1xf32, #tpu.memory_space<vmem>>, vector<50x1xf32>
    %19 = vector.broadcast %18 : vector<50x1xf32> to vector<50x128xf32>
    %20 = arith.addf %17, %19 : vector<50x128xf32>
    %21 = math.tanh %20 : vector<50x128xf32>
    %c0_13 = arith.constant 0 : index
    %c0_14 = arith.constant 0 : index
    %22 = vector.load %arg7[%c0_13, %c0_14] : memref<2x50xf32, #tpu.memory_space<vmem>>, vector<2x50xf32>
    %cst_15 = arith.constant dense<0.000000e+00> : vector<2x128xf32>
    %23 = tpu.matmul %22, %21, %cst_15 {dimension_numbers = #tpu.dot_dimension_numbers<[1], [0], [0], [1], [0, 0, 1, 1], [], []>} : vector<2x50xf32>, vector<50x128xf32>, vector<2x128xf32> -> vector<2x128xf32>
    %c0_16 = arith.constant 0 : index
    %c0_17 = arith.constant 0 : index
    %24 = vector.load %arg8[%c0_16, %c0_17] : memref<2x1xf32, #tpu.memory_space<vmem>>, vector<2x1xf32>
    %25 = vector.broadcast %24 : vector<2x1xf32> to vector<2x128xf32>
    %26 = arith.addf %23, %25 : vector<2x128xf32>
    %cst_18 = arith.constant 2.500000e-01 : f32
    %27 = vector.broadcast %cst_18 : f32 to vector<2x128xf32>
    %28 = arith.mulf %27, %26 : vector<2x128xf32>
    %29 = arith.addf %2, %28 : vector<2x128xf32>
    %c0_19 = arith.constant 0 : index
    %c0_20 = arith.constant 0 : index
    %30 = vector.load %arg9[%c0_19, %c0_20] : memref<2x128xf32, #tpu.memory_space<vmem>>, vector<2x128xf32>
    tpu.vector_store %arg9[%c0_19, %c0_20], %29 {strides = array<i32>} : memref<2x128xf32, #tpu.memory_space<vmem>>, vector<2x128xf32>,
    return
  }
  func.func @transform_0(%arg0: i32) -> (i32, i32) {
    %c0_i32 = arith.constant 0 : i32
    %c0_i32_0 = arith.constant 0 : i32
    return %c0_i32, %arg0 : i32, i32
  }
  func.func @transform_1(%arg0: i32) -> (i32, i32) {
    %c0_i32 = arith.constant 0 : i32
    %c0_i32_0 = arith.constant 0 : i32
    %c0_i32_1 = arith.constant 0 : i32
    return %c0_i32, %c0_i32_0 : i32, i32
  }
  func.func @transform_2(%arg0: i32) -> (i32, i32) {
    %c0_i32 = arith.constant 0 : i32
    %c0_i32_0 = arith.constant 0 : i32
    %c0_i32_1 = arith.constant 0 : i32
    return %c0_i32, %c0_i32_0 : i32, i32
  }
  func.func @transform_3(%arg0: i32) -> (i32, i32) {
    %c0_i32 = arith.constant 0 : i32
    %c0_i32_0 = arith.constant 0 : i32
    %c0_i32_1 = arith.constant 0 : i32
    return %c0_i32, %c0_i32_0 : i32, i32
  }
  func.func @transform_4(%arg0: i32) -> (i32, i32) {
    %c0_i32 = arith.constant 0 : i32
    %c0_i32_0 = arith.constant 0 : i32
    %c0_i32_1 = arith.constant 0 : i32
    return %c0_i32, %c0_i32_0 : i32, i32
  }
  func.func @transform_5(%arg0: i32) -> (i32, i32) {
    %c0_i32 = arith.constant 0 : i32
    %c0_i32_0 = arith.constant 0 : i32
    %c0_i32_1 = arith.constant 0 : i32
    return %c0_i32, %c0_i32_0 : i32, i32
  }
  func.func @transform_6(%arg0: i32) -> (i32, i32) {
    %c0_i32 = arith.constant 0 : i32
    %c0_i32_0 = arith.constant 0 : i32
    %c0_i32_1 = arith.constant 0 : i32
    return %c0_i32, %c0_i32_0 : i32, i32
  }
  func.func @transform_7(%arg0: i32) -> (i32, i32) {
    %c0_i32 = arith.constant 0 : i32
    %c0_i32_0 = arith.constant 0 : i32
    %c0_i32_1 = arith.constant 0 : i32
    return %c0_i32, %c0_i32_0 : i32, i32
  }
  func.func @transform_8(%arg0: i32) -> (i32, i32) {
    %c0_i32 = arith.constant 0 : i32
    %c0_i32_0 = arith.constant 0 : i32
    return %c0_i32, %arg0 : i32, i32
  }
}

</mosaic_0001>

<llo_original>
// kernel: tpu_custom_call.1
$region0: #{tpu_custom_call.1}
  #allocation0 [shape = 'u32[]', space=smem, size = 0x4, offset = 0x4, fixed_abs, tag = 'smem constant byte address 0x4 - core index']
  #allocation1 [shape = 'u32[144,128]{1,0:T(1,128)}', space=vmem, size = 0x12000, scoped, tag = 'internal scratch']
  %s0 = inlined_call_operand.vmem [shape: f32[4,128], index: 0, kind: input, shape index: {}]
  %s1 = inlined_call_operand.vmem [shape: f32[50,1], index: 1, kind: input, shape index: {}]
  %s2 = inlined_call_operand.vmem [shape: f32[50,1], index: 2, kind: input, shape index: {}]
  %s3 = inlined_call_operand.vmem [shape: f32[50,1], index: 3, kind: input, shape index: {}]
  %s4 = inlined_call_operand.vmem [shape: f32[50,50], index: 4, kind: input, shape index: {}]
  %s5 = inlined_call_operand.vmem [shape: f32[50,1], index: 5, kind: input, shape index: {}]
  %s6 = inlined_call_operand.vmem [shape: f32[2,50], index: 6, kind: input, shape index: {}]
  %s7 = inlined_call_operand.vmem [shape: f32[2,1], index: 7, kind: input, shape index: {}]
  %s8 = inlined_call_operand.hbm [shape: f32[2,128], index: 8, kind: output, shape index: {}]
  %s9 = sld [smem:[#allocation0]]
  $region42: #{tpu_custom_call.1} parent=0
    _
  %s11 = ssub.s32 1, %s9
  %s12 = scalar_select 0, %s11, %s9
  $region1: #{tpu_custom_call.1} parent=0
    #allocation2 [shape = 'u8[1024]{0}', space=vmem, size = 0x400, scoped, tag = 'output window, operand 0, single buffered']
    #allocation3 [shape = 's32[1]{0}', space=sflag, size = 0x4, scoped, tag = 'scoped memory for tpu_custom_call.1']
    %13 = vsyncpa [#allocation3], 0
    // Predicated region
    $region2: #{tpu_custom_call.1} parent=1 // pred_check
      _
    $region3: #{tpu_custom_call.1} parent=1 // pred_check_branch
      %15 = sbr.rel (0) target = $region5
    $region4: #{tpu_custom_call.1} parent=1 // pred_region
      _
    $region5: #{tpu_custom_call.1} parent=1 // pred_fallthru
      _
    // Predicated region
    $region6: #{tpu_custom_call.1} parent=1 // pred_check
      _
    $region7: #{tpu_custom_call.1} parent=1 // pred_check_branch
      %17 = sbr.rel (0) target = $region9
    $region8: #{tpu_custom_call.1} parent=1 // pred_region
      _
    $region9: #{tpu_custom_call.1} parent=1 // pred_fallthru
      _
    // Predicated region
    $region10: #{tpu_custom_call.1} parent=1 // pred_check
      _
    $region11: #{tpu_custom_call.1} parent=1 // pred_check_branch
      %19 = sbr.rel (0) target = $region13
    $region12: #{tpu_custom_call.1} parent=1 // pred_region
      _
    $region13: #{tpu_custom_call.1} parent=1 // pred_fallthru
      _
    // Predicated region
    $region14: #{tpu_custom_call.1} parent=1 // pred_check
      _
    $region15: #{tpu_custom_call.1} parent=1 // pred_check_branch
      %21 = sbr.rel (0) target = $region17
    $region16: #{tpu_custom_call.1} parent=1 // pred_region
      _
    $region17: #{tpu_custom_call.1} parent=1 // pred_fallthru
      _
    // Predicated region
    $region18: #{tpu_custom_call.1} parent=1 // pred_check
      _
    $region19: #{tpu_custom_call.1} parent=1 // pred_check_branch
      %23 = sbr.rel (0) target = $region21
    $region20: #{tpu_custom_call.1} parent=1 // pred_region
      _
    $region21: #{tpu_custom_call.1} parent=1 // pred_fallthru
      _
    // Predicated region
    $region22: #{tpu_custom_call.1} parent=1 // pred_check
      _
    $region23: #{tpu_custom_call.1} parent=1 // pred_check_branch
      %25 = sbr.rel (0) target = $region25
    $region24: #{tpu_custom_call.1} parent=1 // pred_region
      _
    $region25: #{tpu_custom_call.1} parent=1 // pred_fallthru
      _
    // Predicated region
    $region26: #{tpu_custom_call.1} parent=1 // pred_check
      _
    $region27: #{tpu_custom_call.1} parent=1 // pred_check_branch
      %27 = sbr.rel (0) target = $region29
    $region28: #{tpu_custom_call.1} parent=1 // pred_region
      _
    $region29: #{tpu_custom_call.1} parent=1 // pred_fallthru
      _
    // Predicated region
    $region30: #{tpu_custom_call.1} parent=1 // pred_check
      _
    $region31: #{tpu_custom_call.1} parent=1 // pred_check_branch
      %29 = sbr.rel (0) target = $region33
    $region32: #{tpu_custom_call.1} parent=1 // pred_region
      _
    $region33: #{tpu_custom_call.1} parent=1 // pred_fallthru
      _
    %v30 = vld [vmem:[%s0] sm:$0x1]
    %v31 = vld [vmem:[%s0 + $0x1] sm:$0x1]
    %v32 = vld [vmem:[%s0 + $0x2] sm:$0x3]
    %v33 = vld [vmem:[%s1] sm:$0xff]
    %v34 = vld [vmem:[%s1 + $0x8] sm:$0xff]
    %v35 = vld [vmem:[%s1 + $0x10] sm:$0xff]
    %v36 = vld [vmem:[%s1 + $0x18] sm:$0xff]
    %v37 = vld [vmem:[%s1 + $0x20] sm:$0xff]
    %v38 = vld [vmem:[%s1 + $0x28] sm:$0xff]
    %v39 = vld [vmem:[%s1 + $0x30] sm:$0x3]
    %41 = vset.pattern.permute.xlu0 0
    %42 = vperm.xlu0 %41, %v33
    %v43 = vpop.permute.xlu0 %42
    %46 = vset.pattern.permute.xlu0 0
    %47 = vperm.xlu0 %46, %v34
    %v48 = vpop.permute.xlu0 %47
    %51 = vset.pattern.permute.xlu0 0
    %52 = vperm.xlu0 %51, %v35
    %v53 = vpop.permute.xlu0 %52
    %56 = vset.pattern.permute.xlu0 0
    %57 = vperm.xlu0 %56, %v36
    %v58 = vpop.permute.xlu0 %57
    %61 = vset.pattern.permute.xlu0 0
    %62 = vperm.xlu0 %61, %v37
    %v63 = vpop.permute.xlu0 %62
    %66 = vset.pattern.permute.xlu0 0
    %67 = vperm.xlu0 %66, %v38
    %v68 = vpop.permute.xlu0 %67
    %71 = vset.pattern.permute.xlu0 0
    %72 = vperm.xlu0 %71, %v39
    %v73 = vpop.permute.xlu0 %72
    %v75 = vlaneseq
    %v76 = vshrl.u32 %v75, 7
    %v77 = vsub.s32 0, %v76
    %v78 = vrot.slane %v30, %v77
    %v79 = vmul.f32 %v43, %v78
    %v80 = vmul.f32 %v48, %v78
    %v81 = vmul.f32 %v53, %v78
    %v82 = vmul.f32 %v58, %v78
    %v83 = vmul.f32 %v63, %v78
    %v84 = vmul.f32 %v68, %v78
    %v85 = vmul.f32 %v73, %v78
    %v86 = vld [vmem:[%s2] sm:$0xff]
    %v87 = vld [vmem:[%s2 + $0x8] sm:$0xff]
    %v88 = vld [vmem:[%s2 + $0x10] sm:$0xff]
    %v89 = vld [vmem:[%s2 + $0x18] sm:$0xff]
    %v90 = vld [vmem:[%s2 + $0x20] sm:$0xff]
    %v91 = vld [vmem:[%s2 + $0x28] sm:$0xff]
    %v92 = vld [vmem:[%s2 + $0x30] sm:$0x3]
    %94 = vset.pattern.permute.xlu0 0
    %95 = vperm.xlu0 %94, %v86
    %v96 = vpop.permute.xlu0 %95
    %99 = vset.pattern.permute.xlu0 0
    %100 = vperm.xlu0 %99, %v87
    %v101 = vpop.permute.xlu0 %100
    %104 = vset.pattern.permute.xlu0 0
    %105 = vperm.xlu0 %104, %v88
    %v106 = vpop.permute.xlu0 %105
    %109 = vset.pattern.permute.xlu0 0
    %110 = vperm.xlu0 %109, %v89
    %v111 = vpop.permute.xlu0 %110
    %114 = vset.pattern.permute.xlu0 0
    %115 = vperm.xlu0 %114, %v90
    %v116 = vpop.permute.xlu0 %115
    %119 = vset.pattern.permute.xlu0 0
    %120 = vperm.xlu0 %119, %v91
    %v121 = vpop.permute.xlu0 %120
    %124 = vset.pattern.permute.xlu0 0
    %125 = vperm.xlu0 %124, %v92
    %v126 = vpop.permute.xlu0 %125
    %v128 = vlaneseq
    %v129 = vshrl.u32 %v128, 7
    %v130 = vsub.s32 0, %v129
    %v131 = vrot.slane %v31, %v130
    %v132 = vmul.f32 %v96, %v131
    %v133 = vmul.f32 %v101, %v131
    %v134 = vmul.f32 %v106, %v131
    %v135 = vmul.f32 %v111, %v131
    %v136 = vmul.f32 %v116, %v131
    %v137 = vmul.f32 %v121, %v131
    %v138 = vmul.f32 %v126, %v131
    %v139 = vadd.f32 %v79, %v132
    %v140 = vadd.f32 %v80, %v133
    %v141 = vadd.f32 %v81, %v134
    %v142 = vadd.f32 %v82, %v135
    %v143 = vadd.f32 %v83, %v136
    %v144 = vadd.f32 %v84, %v137
    %v145 = vadd.f32 %v85, %v138
    %v146 = vld [vmem:[%s3] sm:$0xff]
    %v147 = vld [vmem:[%s3 + $0x8] sm:$0xff]
    %v148 = vld [vmem:[%s3 + $0x10] sm:$0xff]
    %v149 = vld [vmem:[%s3 + $0x18] sm:$0xff]
    %v150 = vld [vmem:[%s3 + $0x20] sm:$0xff]
    %v151 = vld [vmem:[%s3 + $0x28] sm:$0xff]
    %v152 = vld [vmem:[%s3 + $0x30] sm:$0x3]
    %154 = vset.pattern.permute.xlu0 0
    %155 = vperm.xlu0 %154, %v146
    %v156 = vpop.permute.xlu0 %155
    %159 = vset.pattern.permute.xlu0 0
    %160 = vperm.xlu0 %159, %v147
    %v161 = vpop.permute.xlu0 %160
    %164 = vset.pattern.permute.xlu0 0
    %165 = vperm.xlu0 %164, %v148
    %v166 = vpop.permute.xlu0 %165
    %169 = vset.pattern.permute.xlu0 0
    %170 = vperm.xlu0 %169, %v149
    %v171 = vpop.permute.xlu0 %170
    %174 = vset.pattern.permute.xlu0 0
    %175 = vperm.xlu0 %174, %v150
    %v176 = vpop.permute.xlu0 %175
    %179 = vset.pattern.permute.xlu0 0
    %180 = vperm.xlu0 %179, %v151
    %v181 = vpop.permute.xlu0 %180
    %184 = vset.pattern.permute.xlu0 0
    %185 = vperm.xlu0 %184, %v152
    %v186 = vpop.permute.xlu0 %185
    %v188 = vadd.f32 %v139, %v156
    %v189 = vadd.f32 %v140, %v161
    %v190 = vadd.f32 %v141, %v166
    %v191 = vadd.f32 %v142, %v171
    %v192 = vadd.f32 %v143, %v176
    %v193 = vadd.f32 %v144, %v181
    %v194 = vadd.f32 %v145, %v186
    %v195 = vtanh.pop %v188
    %v196 = vtanh.pop %v189
    %v197 = vtanh.pop %v190
    %v198 = vtanh.pop %v191
    %v199 = vtanh.pop %v192
    %v200 = vtanh.pop %v193
    %v201 = vtanh.pop %v194
    %v202 = vld [vmem:[%s4] sm:$0xff]
    %v203 = vld [vmem:[%s4 + $0x8] sm:$0xff]
    %v204 = vld [vmem:[%s4 + $0x10] sm:$0xff]
    %v205 = vld [vmem:[%s4 + $0x18] sm:$0xff]
    %v206 = vld [vmem:[%s4 + $0x20] sm:$0xff]
    %v207 = vld [vmem:[%s4 + $0x28] sm:$0xff]
    %v208 = vld [vmem:[%s4 + $0x30] sm:$0x3]
    %v209 = vld [vmem:[%s5] sm:$0xff]
    %v210 = vld [vmem:[%s5 + $0x8] sm:$0xff]
    %v211 = vld [vmem:[%s5 + $0x10] sm:$0xff]
    %v212 = vld [vmem:[%s5 + $0x18] sm:$0xff]
    %v213 = vld [vmem:[%s5 + $0x20] sm:$0xff]
    %v214 = vld [vmem:[%s5 + $0x28] sm:$0xff]
    %v215 = vld [vmem:[%s5 + $0x30] sm:$0x3]
    %217 = vset.pattern.permute.xlu0 0
    %218 = vperm.xlu0 %217, %v209
    %v219 = vpop.permute.xlu0 %218
    %222 = vset.pattern.permute.xlu0 0
    %223 = vperm.xlu0 %222, %v210
    %v224 = vpop.permute.xlu0 %223
    %227 = vset.pattern.permute.xlu0 0
    %228 = vperm.xlu0 %227, %v211
    %v229 = vpop.permute.xlu0 %228
    %232 = vset.pattern.permute.xlu0 0
    %233 = vperm.xlu0 %232, %v212
    %v234 = vpop.permute.xlu0 %233
    %237 = vset.pattern.permute.xlu0 0
    %238 = vperm.xlu0 %237, %v213
    %v239 = vpop.permute.xlu0 %238
    %242 = vset.pattern.permute.xlu0 0
    %243 = vperm.xlu0 %242, %v214
    %v244 = vpop.permute.xlu0 %243
    %247 = vset.pattern.permute.xlu0 0
    %248 = vperm.xlu0 %247, %v215
    %v249 = vpop.permute.xlu0 %248
    %vm251 = vcmask 408576
    %v253 = vsel %vm251, %v202, 0
    %v256 = vsel %vm251, %v203, 0
    %v259 = vsel %vm251, %v204, 0
    %v262 = vsel %vm251, %v205, 0
    %v265 = vsel %vm251, %v206, 0
    %v268 = vsel %vm251, %v207, 0
    %v271 = vsel %vm251, %v208, 0
    %vm273 = vcmask 1041408
    %v275 = vsel %vm273, %v201, 0
    %277 = vmatprep.subr.mxu0 0.0
    %278 = vmatpush1.msra.mxu0 0.0
    %279 = vmatprep.subr.mxu0 0.0
    %280 = vmatpush1.msra.mxu0 0.0
    %281 = vmatprep.subr.mxu0 0.0
    %282 = vmatpush1.msra.mxu0 0.0
    %283 = vmatprep.subr.mxu0 0.0
    %284 = vmatpush1.msra.mxu0 0.0
    %285 = vmatprep.subr.mxu0 0.0
    %286 = vmatpush1.msra.mxu0 0.0
    %287 = vmatprep.subr.mxu0 0.0
    %288 = vmatpush1.msra.mxu0 0.0
    %289 = vmatprep.subr.mxu0 0.0
    %290 = vmatpush1.msra.mxu0 0.0
    %291 = vmatprep.subr.mxu0 0.0
    %292 = vmatpush1.msra.mxu0 0.0
    %293 = vmatprep.subr.mxu0 0.0
    %294 = vmatpush1.msra.mxu0 0.0
    %295 = vmatprep.subr.mxu0 0.0
    %296 = vmatpush1.msra.mxu0 %v275
    %297 = vmatprep.subr.mxu0 0.0
    %298 = vmatpush1.msra.mxu0 %v200
    %299 = vmatprep.subr.mxu0 0.0
    %300 = vmatpush1.msra.mxu0 %v199
    %301 = vmatprep.subr.mxu0 0.0
    %302 = vmatpush1.msra.mxu0 %v198
    %303 = vmatprep.subr.mxu0 0.0
    %304 = vmatpush1.msra.mxu0 %v197
    %305 = vmatprep.subr.mxu0 0.0
    %306 = vmatpush1.msra.mxu0 %v196
    %307 = vmatprep.subr.mxu0 0.0
    %308 = vmatpush1.msra.mxu0 %v195
    %309 = vmatprep.subr.mxu0 0.0
    %310 = vmatpush2.msra.mxu0 0.0
    %311 = vmatprep.subr.mxu0 0.0
    %312 = vmatpush2.msra.mxu0 0.0
    %313 = vmatprep.subr.mxu0 0.0
    %314 = vmatpush2.msra.mxu0 0.0
    %315 = vmatprep.subr.mxu0 0.0
    %316 = vmatpush2.msra.mxu0 0.0
    %317 = vmatprep.subr.mxu0 0.0
    %318 = vmatpush2.msra.mxu0 0.0
    %319 = vmatprep.subr.mxu0 0.0
    %320 = vmatpush2.msra.mxu0 0.0
    %321 = vmatprep.subr.mxu0 0.0
    %322 = vmatpush2.msra.mxu0 0.0
    %323 = vmatprep.subr.mxu0 0.0
    %324 = vmatpush2.msra.mxu0 0.0
    %325 = vmatprep.subr.mxu0 0.0
    %326 = vmatpush2.msra.mxu0 0.0
    %327 = vmatprep.subr.mxu0 0.0
    %328 = vmatpush2.msra.mxu0 0.0
    %329 = vmatprep.subr.mxu0 0.0
    %330 = vmatpush2.msra.mxu0 0.0
    %331 = vmatprep.subr.mxu0 0.0
    %332 = vmatpush2.msra.mxu0 0.0
    %333 = vmatprep.subr.mxu0 0.0
    %334 = vmatpush2.msra.mxu0 0.0
    %335 = vmatprep.subr.mxu0 0.0
    %336 = vmatpush2.msra.mxu0 0.0
    %337 = vmatprep.subr.mxu0 0.0
    %338 = vmatpush2.msra.mxu0 0.0
    %339 = vmatprep.subr.mxu0 0.0
    %340 = vmatpush2.msra.mxu0 0.0
    %341 = vmatprep.mubr.f32.mxu0 0.0
    %342 = vmatmul.mubr.f32.gmra.mxu0 %v253
    %v343 = vpop.f32.mrf.mxu0
    %v344 = vadd.f32 %v219, %v343
    %v345 = vpop.f32.mrf.mxu0
    %346 = vmatprep.mubr.f32.mxu0 0.0
    %347 = vmatmul.mubr.f32.gmra.mxu0 %v256
    %v348 = vpop.f32.mrf.mxu0
    %v349 = vadd.f32 %v224, %v348
    %v350 = vpop.f32.mrf.mxu0
    %351 = vmatprep.mubr.f32.mxu0 0.0
    %352 = vmatmul.mubr.f32.gmra.mxu0 %v259
    %v353 = vpop.f32.mrf.mxu0
    %v354 = vadd.f32 %v229, %v353
    %v355 = vpop.f32.mrf.mxu0
    %356 = vmatprep.mubr.f32.mxu0 0.0
    %357 = vmatmul.mubr.f32.gmra.mxu0 %v262
    %v358 = vpop.f32.mrf.mxu0
    %v359 = vadd.f32 %v234, %v358
    %v360 = vpop.f32.mrf.mxu0
    %361 = vmatprep.mubr.f32.mxu0 0.0
    %362 = vmatmul.mubr.f32.gmra.mxu0 %v265
    %v363 = vpop.f32.mrf.mxu0
    %v364 = vadd.f32 %v239, %v363
    %v365 = vpop.f32.mrf.mxu0
    %366 = vmatprep.mubr.f32.mxu0 0.0
    %367 = vmatmul.mubr.f32.gmra.mxu0 %v268
    %v368 = vpop.f32.mrf.mxu0
    %v369 = vadd.f32 %v244, %v368
    %v370 = vpop.f32.mrf.mxu0
    %371 = vmatprep.mubr.f32.mxu0 0.0
    %372 = vmatmul.mubr.f32.gmra.mxu0 %v271
    %v373 = vpop.f32.mrf.mxu0
    %v374 = vadd.f32 %v249, %v373
    %v375 = vpop.f32.mrf.mxu0
    %376 = vdwg.mxu0
    %v377 = vtanh.pop %v344
    %v378 = vtanh.pop %v349
    %v379 = vtanh.pop %v354
    %v380 = vtanh.pop %v359
    %v381 = vtanh.pop %v364
    %v382 = vtanh.pop %v369
    %v383 = vtanh.pop %v374
    %v384 = vld [vmem:[%s6] sm:$0x3]
    %v385 = vld [vmem:[%s7] sm:$0x3]
    %387 = vset.pattern.permute.xlu0 0
    %388 = vperm.xlu0 %387, %v385
    %v389 = vpop.permute.xlu0 %388
    %v392 = vsel %vm251, %v384, 0
    %v395 = vsel %vm273, %v383, 0
    %397 = vmatprep.subr.mxu0 0.0
    %398 = vmatpush1.msra.mxu0 0.0
    %399 = vmatprep.subr.mxu0 0.0
    %400 = vmatpush1.msra.mxu0 0.0
    %401 = vmatprep.subr.mxu0 0.0
    %402 = vmatpush1.msra.mxu0 0.0
    %403 = vmatprep.subr.mxu0 0.0
    %404 = vmatpush1.msra.mxu0 0.0
    %405 = vmatprep.subr.mxu0 0.0
    %406 = vmatpush1.msra.mxu0 0.0
    %407 = vmatprep.subr.mxu0 0.0
    %408 = vmatpush1.msra.mxu0 0.0
    %409 = vmatprep.subr.mxu0 0.0
    %410 = vmatpush1.msra.mxu0 0.0
    %411 = vmatprep.subr.mxu0 0.0
    %412 = vmatpush1.msra.mxu0 0.0
    %413 = vmatprep.subr.mxu0 0.0
    %414 = vmatpush1.msra.mxu0 0.0
    %415 = vmatprep.subr.mxu0 0.0
    %416 = vmatpush1.msra.mxu0 %v395
    %417 = vmatprep.subr.mxu0 0.0
    %418 = vmatpush1.msra.mxu0 %v382
    %419 = vmatprep.subr.mxu0 0.0
    %420 = vmatpush1.msra.mxu0 %v381
    %421 = vmatprep.subr.mxu0 0.0
    %422 = vmatpush1.msra.mxu0 %v380
    %423 = vmatprep.subr.mxu0 0.0
    %424 = vmatpush1.msra.mxu0 %v379
    %425 = vmatprep.subr.mxu0 0.0
    %426 = vmatpush1.msra.mxu0 %v378
    %427 = vmatprep.subr.mxu0 0.0
    %428 = vmatpush1.msra.mxu0 %v377
    %429 = vmatprep.subr.mxu0 0.0
    %430 = vmatpush2.msra.mxu0 0.0
    %431 = vmatprep.subr.mxu0 0.0
    %432 = vmatpush2.msra.mxu0 0.0
    %433 = vmatprep.subr.mxu0 0.0
    %434 = vmatpush2.msra.mxu0 0.0
    %435 = vmatprep.subr.mxu0 0.0
    %436 = vmatpush2.msra.mxu0 0.0
    %437 = vmatprep.subr.mxu0 0.0
    %438 = vmatpush2.msra.mxu0 0.0
    %439 = vmatprep.subr.mxu0 0.0
    %440 = vmatpush2.msra.mxu0 0.0
    %441 = vmatprep.subr.mxu0 0.0
    %442 = vmatpush2.msra.mxu0 0.0
    %443 = vmatprep.subr.mxu0 0.0
    %444 = vmatpush2.msra.mxu0 0.0
    %445 = vmatprep.subr.mxu0 0.0
    %446 = vmatpush2.msra.mxu0 0.0
    %447 = vmatprep.subr.mxu0 0.0
    %448 = vmatpush2.msra.mxu0 0.0
    %449 = vmatprep.subr.mxu0 0.0
    %450 = vmatpush2.msra.mxu0 0.0
    %451 = vmatprep.subr.mxu0 0.0
    %452 = vmatpush2.msra.mxu0 0.0
    %453 = vmatprep.subr.mxu0 0.0
    %454 = vmatpush2.msra.mxu0 0.0
    %455 = vmatprep.subr.mxu0 0.0
    %456 = vmatpush2.msra.mxu0 0.0
    %457 = vmatprep.subr.mxu0 0.0
    %458 = vmatpush2.msra.mxu0 0.0
    %459 = vmatprep.subr.mxu0 0.0
    %460 = vmatpush2.msra.mxu0 0.0
    %461 = vmatprep.mubr.f32.mxu0 0.0
    %462 = vmatmul.mubr.f32.gmra.mxu0 %v392
    %v463 = vpop.f32.mrf.mxu0
    %v464 = vadd.f32 %v389, %v463
    %v465 = vpop.f32.mrf.mxu0
    %466 = vdwg.mxu0
    %v467 = vmul.f32 %v464, 0.25
    %v468 = vadd.f32 %v32, %v467
    %469 = vst [vmem:[#allocation2] sm:$0x3] %v468
    // Predicated region
    $region34: #{tpu_custom_call.1} parent=1 // pred_check
      _
    $region35: #{tpu_custom_call.1} parent=1 // pred_check_branch
      %471 = sbr.rel (0) target = $region37
    $region36: #{tpu_custom_call.1} parent=1 // pred_region
      %s473 = ssub.s32 32, 32
      %474 = vsyncadd [#allocation3], %s473
      %s476 = sshll.u32 [#allocation2], 4
      %s477 = int_to_ptr.vmem [resolvable:$true] %s476
      %479 = dma.vmem_to_hbm [thread:$0]  %s477, 32, %s8, [#allocation3]
    $region37: #{tpu_custom_call.1} parent=1 // pred_fallthru
      _
    // Predicated region
    $region38: #{tpu_custom_call.1} parent=1 // pred_check
      _
    $region39: #{tpu_custom_call.1} parent=1 // pred_check_branch
      %481 = sbr.rel (0) target = $region41
    $region40: #{tpu_custom_call.1} parent=1 // pred_region
      %482 = dma.done [#allocation3], 32
    $region41: #{tpu_custom_call.1} parent=1 // pred_fallthru
      _
    %483 = vsyncpa [#allocation3], 1

</llo_original>
